<compile_context>
chip_gen: v5e
topology: v5e:2x2
jax: 0.10.0
libtpu: 0.0.40
codegen_flags: <defaults>
</compile_context>

<pallas_src>
import numpy as np
import jax
import jax.numpy as jnp
from jax.experimental import pallas as pl
from jax.experimental.pallas import tpu as pltpu

LANE = 128  # TPU lane width


# ----------------------------- Pallas kernel --------------------------------
def ndn_kernel(x_ref, w_ref, be_ref, o_ref):
    """One row-tile: o = relu(x @ w + bias) * ei_mask.

    x_ref : (tm, D)  bf16   -- streamed over the grid
    w_ref : (D, Fp)  bf16   -- resident (constant index map)
    be_ref: (2, Fp)  f32    -- row 0 = bias, row 1 = ei_mask (resident)
    o_ref : (tm, Fp) f32
    """
    y = jnp.dot(x_ref[...], w_ref[...], preferred_element_type=jnp.float32)
    y = jnp.maximum(y + be_ref[0:1, :], 0.0)          # bias + relu
    o_ref[...] = (y * be_ref[1:2, :]).astype(o_ref.dtype)   # ei_mask


def ndn_forward(x, w, bias, ei_mask, *, tm=128, compute_dtype=jnp.bfloat16):
    """x: [T, D] f32, w: [D, F] f32 (already preprocessed), bias/ei_mask: [F]."""
    T, D = x.shape
    F = w.shape[1]

    # Lane-dense filter axis (pad to multiple of 128).
    Fp = ((F + LANE - 1) // LANE) * LANE
    # Row-tile the time/batch axis; keep tiles a multiple of 8 sublanes.
    tm = min(tm, ((T + 7) // 8) * 8)
    Tp = pl.cdiv(T, tm) * tm

    # Cast hot-path operands to bf16; pad to tile/lane boundaries with zeros.
    x_p = jnp.zeros((Tp, D), compute_dtype).at[:T, :].set(x.astype(compute_dtype))
    w_p = jnp.zeros((D, Fp), compute_dtype).at[:, :F].set(w.astype(compute_dtype))

    # bias (row 0, zero-padded) and ei_mask (row 1, padded with 1s) in one buffer.
    be = jnp.ones((2, Fp), jnp.float32)
    be = be.at[0, :].set(0.0).at[0, :F].set(bias.astype(jnp.float32))
    be = be.at[1, :F].set(ei_mask.astype(jnp.float32))

    out = pl.pallas_call(
        ndn_kernel,
        out_shape=jax.ShapeDtypeStruct((Tp, Fp), jnp.float32),
        grid_spec=pltpu.PrefetchScalarGridSpec(
            num_scalar_prefetch=0,
            grid=(Tp // tm,),
            in_specs=[
                pl.BlockSpec((tm, D), lambda i: (i, 0)),   # x: streamed row tiles
                pl.BlockSpec((D, Fp), lambda i: (0, 0)),   # w: resident
                pl.BlockSpec((2, Fp), lambda i: (0, 0)),   # bias+ei_mask: resident
            ],
            out_specs=pl.BlockSpec((tm, Fp), lambda i: (i, 0)),
        ),
        compiler_params=pltpu.CompilerParams(
            dimension_semantics=("parallel",),   # independent row tiles (megacore on v7x)
        ),
    )(x_p, w_p, be)

    return out[:T, :F]


# ------------------------- parameter setup (glue) ---------------------------
def preprocess_weights(weight, *, pos_constraint, norm_type, weight_scale):
    """Mirror of NDNLayer.preprocess_weights (parameter-side, not in the hot path)."""
    if pos_constraint > 0:
        w = jnp.square(weight)
    elif pos_constraint < 0:
        w = -jnp.square(weight)
    else:
        w = weight
    if norm_type == 1:
        # F.normalize(w, dim=0): divide each column by max(||col||_2, eps), then / weight_scale
        col_norm = jnp.sqrt(jnp.sum(w * w, axis=0, keepdims=True))
        w = w / jnp.maximum(col_norm, 1e-12)
        w = w / weight_scale
    return w


if __name__ == "__main__":
    # NDNLayer config:
    #   input_dims = [C, H, W, Lags] = [4, 16, 16, 1]  -> D = 1024
    #   num_filters = 32, NLtype='relu', norm_type=1, pos_constraint=1,
    #   num_inh=8, bias=True
    input_dims = [4, 16, 16, 1]
    num_filters = 32
    num_inh = 8
    pos_constraint = 1
    norm_type = 1

    D = int(np.prod(input_dims))
    F_ = num_filters
    T = 256  # time points / batch

    weight_scale = np.sqrt(D) / 100.0

    key = jax.random.PRNGKey(0)
    kx, kw, kb = jax.random.split(key, 3)

    # Deterministic synthetic parameter init (xavier-uniform-like scale).
    bound = float(np.sqrt(6.0 / (D + F_)))
    weight = jax.random.uniform(kw, (D, F_), jnp.float32, -bound, bound)
    # reset_parameters applies sqrt(abs(w)) when pos_constraint > 0
    weight = jnp.sqrt(jnp.abs(weight))
    bias = jax.random.uniform(kb, (F_,), jnp.float32, -0.1, 0.1)

    # ei_mask: last num_inh filters are inhibitory (-1)
    ei_mask = jnp.concatenate(
        [jnp.ones((F_ - num_inh,), jnp.float32), -jnp.ones((num_inh,), jnp.float32)]
    )

    # Input (flattened [T, C*H*W*Lags]).
    x = jax.random.normal(kx, (T, D), jnp.float32)

    # Preprocess weights (same math as the torch module's preprocess_weights).
    w_pre = preprocess_weights(
        weight,
        pos_constraint=pos_constraint,
        norm_type=norm_type,
        weight_scale=weight_scale,
    )

    out = ndn_forward(x, w_pre, bias, ei_mask)
    out = jax.block_until_ready(out)

    # Pure-JAX reference using the same bf16-cast operands the kernel consumes.
    x_bf = x.astype(jnp.bfloat16).astype(jnp.float32)
    w_bf = w_pre.astype(jnp.bfloat16).astype(jnp.float32)
    ref = jnp.maximum(x_bf @ w_bf + bias, 0.0) * ei_mask
    np.testing.assert_allclose(np.asarray(out), np.asarray(ref), rtol=1e-3, atol=1e-3)

    print("KERNEL_OK")
</pallas_src>

<mosaic_0001>
module attributes {stable_mosaic.version = 11 : i64} {
  func.func @ndn_kernel(%arg0: i32, %arg1: memref<128x1024xbf16, #tpu.memory_space<vmem>>, %arg2: memref<1024x128xbf16, #tpu.memory_space<vmem>>, %arg3: memref<2x128xf32, #tpu.memory_space<vmem>>, %arg4: memref<128x128xf32, #tpu.memory_space<vmem>>) attributes {dimension_semantics = [#tpu.dimension_semantics<parallel>], iteration_bounds = array<i64: 2>, scalar_prefetch = 0 : i64, scratch_operands = 0 : i64, tpu.core_type = #tpu.core_type<tc>, window_params = [{transform_indices = @transform_0, window_bounds = array<i64: 128, 1024>}, {pipeline_mode = #tpu.pipeline_mode<synchronous>, transform_indices = @transform_1, window_bounds = array<i64: 1024, 128>}, {pipeline_mode = #tpu.pipeline_mode<synchronous>, transform_indices = @transform_2, window_bounds = array<i64: 2, 128>}, {transform_indices = @transform_3, window_bounds = array<i64: 128, 128>}]} {
    %c0 = arith.constant 0 : index
    %c0_0 = arith.constant 0 : index
    %0 = vector.load %arg1[%c0, %c0_0] : memref<128x1024xbf16, #tpu.memory_space<vmem>>, vector<128x1024xbf16>
    %c0_1 = arith.constant 0 : index
    %c0_2 = arith.constant 0 : index
    %1 = vector.load %arg2[%c0_1, %c0_2] : memref<1024x128xbf16, #tpu.memory_space<vmem>>, vector<1024x128xbf16>
    %cst = arith.constant dense<0.000000e+00> : vector<128x128xf32>
    %2 = tpu.matmul %0, %1, %cst {dimension_numbers = #tpu.dot_dimension_numbers<[1], [0], [0], [1], [0, 0, 1, 1], [], []>} : vector<128x1024xbf16>, vector<1024x128xbf16>, vector<128x128xf32> -> vector<128x128xf32>
    %c0_3 = arith.constant 0 : index
    %c0_4 = arith.constant 0 : index
    %3 = vector.load %arg3[%c0_3, %c0_4] : memref<2x128xf32, #tpu.memory_space<vmem>>, vector<1x128xf32>
    %4 = vector.broadcast %3 : vector<1x128xf32> to vector<128x128xf32>
    %5 = arith.addf %2, %4 : vector<128x128xf32>
    %cst_5 = arith.constant 0.000000e+00 : f32
    %6 = vector.broadcast %cst_5 : f32 to vector<128x128xf32>
    %7 = arith.maximumf %5, %6 : vector<128x128xf32>
    %c1 = arith.constant 1 : index
    %c0_6 = arith.constant 0 : index
    %8 = vector.load %arg3[%c1, %c0_6] : memref<2x128xf32, #tpu.memory_space<vmem>>, vector<1x128xf32>
    %9 = vector.broadcast %8 : vector<1x128xf32> to vector<128x128xf32>
    %10 = arith.mulf %7, %9 : vector<128x128xf32>
    %c0_7 = arith.constant 0 : index
    %c0_8 = arith.constant 0 : index
    %11 = vector.load %arg4[%c0_7, %c0_8] : memref<128x128xf32, #tpu.memory_space<vmem>>, vector<128x128xf32>
    tpu.vector_store %arg4[%c0_7, %c0_8], %10 {strides = array<i32>} : memref<128x128xf32, #tpu.memory_space<vmem>>, vector<128x128xf32>,
    return
  }
  func.func @transform_0(%arg0: i32) -> (i32, i32) {
    %c0_i32 = arith.constant 0 : i32
    %c0_i32_0 = arith.constant 0 : i32
    return %arg0, %c0_i32 : i32, i32
  }
  func.func @transform_1(%arg0: i32) -> (i32, i32) {
    %c0_i32 = arith.constant 0 : i32
    %c0_i32_0 = arith.constant 0 : i32
    %c0_i32_1 = arith.constant 0 : i32
    return %c0_i32, %c0_i32_0 : i32, i32
  }
  func.func @transform_2(%arg0: i32) -> (i32, i32) {
    %c0_i32 = arith.constant 0 : i32
    %c0_i32_0 = arith.constant 0 : i32
    %c0_i32_1 = arith.constant 0 : i32
    return %c0_i32, %c0_i32_0 : i32, i32
  }
  func.func @transform_3(%arg0: i32) -> (i32, i32) {
    %c0_i32 = arith.constant 0 : i32
    %c0_i32_0 = arith.constant 0 : i32
    return %arg0, %c0_i32 : i32, i32
  }
}

</mosaic_0001>

<llo_original>
// kernel: tpu_custom_call.1
$region0: #{tpu_custom_call.1}
  #allocation0 [shape = 'u32[]', space=smem, size = 0x4, offset = 0x4, fixed_abs, tag = 'smem constant byte address 0x4 - core index']
  #allocation1 [shape = 'u32[72,128]{1,0:T(1,128)}', space=vmem, size = 0x9000, scoped, tag = 'internal scratch']
  %s0 = inlined_call_operand.hbm [shape: bf16[256,1024], index: 0, kind: input, shape index: {}]
  %s1 = inlined_call_operand.hbm [shape: bf16[1024,128], index: 1, kind: input, shape index: {}]
  %s2 = inlined_call_operand.hbm [shape: f32[2,128], index: 2, kind: input, shape index: {}]
  %s3 = inlined_call_operand.hbm [shape: f32[256,128], index: 3, kind: output, shape index: {}]
  %s4 = sld [smem:[#allocation0]]
  $region57: #{tpu_custom_call.1} parent=0
    _
  %s6 = ssub.s32 1, %s4
  %s7 = scalar_select 0, %s6, %s4
  $region1: #{tpu_custom_call.1} parent=0
    #allocation2 [shape = 'u8[524288]{0}', space=vmem, size = 0x80000, scoped, tag = 'input window, operand 0']
    #allocation3 [shape = 's32[2]{0}', space=sflag, size = 0x8, scoped, tag = 'scoped memory for tpu_custom_call.1']
    #allocation4 [shape = 's32[2]{0}', space=sflag, size = 0x8, scoped, tag = 'scoped memory for tpu_custom_call.1']
    #allocation5 [shape = 'u8[262144]{0}', space=vmem, size = 0x40000, scoped, tag = 'input window, operand 1, single buffered']
    #allocation6 [shape = 's32[1]{0}', space=sflag, size = 0x4, scoped, tag = 'scoped memory for tpu_custom_call.1']
    #allocation7 [shape = 'u8[1024]{0}', space=vmem, size = 0x400, scoped, tag = 'input window, operand 2, single buffered']
    #allocation8 [shape = 'u8[131072]{0}', space=vmem, size = 0x20000, scoped, tag = 'output window, operand 0']
    %8 = vsyncpa [#allocation3], 0
    %s9 = scalar_lea.sflag [#allocation3], 1
    %10 = vsyncpa %s9, 0
    %11 = vsyncpa [#allocation6], 0
    %12 = vsyncpa [#allocation4], 0
    %s13 = scalar_lea.sflag [#allocation4], 1
    %14 = vsyncpa %s13, 0
    loop: start=0, step=1, limit=4
    $region2: #{tpu_custom_call.1} parent=1 // loop_pre_header
      _
    $region3: #{tpu_custom_call.1} parent=1 // loop_header
      %s16 = sphi 0, %s20
      %p17 = scmp.ge.s32.totalorder %s16, 4
      %s26 = sphi 0, %s28
      %s29 = sphi 0, %s26
      %s30 = sphi 0, %s29
      %s46 = sphi 0, %s30
      %s50 = sphi 0, %s50
      %s52 = sphi 0, %s50
      %s53 = sphi 0, %s52
      %s67 = sphi 0, %s53
      %s71 = sphi 0, %s71
      %s73 = sphi 0, %s71
      %s74 = sphi 0, %s73
      %s88 = sphi 0, %s74
      %s94 = sphi 0, %s96
      %s97 = sphi 0, %s94
      %s98 = sphi 0, %s97
      %s114 = sphi 0, %s98
    $region4: #{tpu_custom_call.1} parent=1 // loop_header_branch
      %19 = sbr.rel (%p17) target = $region8
    $region5: #{tpu_custom_call.1} parent=1 // loop_body
      %s21 = ssub.s32 %s16, 1
      %s22 = ssub.s32 %s16, 2
      %s23 = sadd.s32 %s16, 1
      %s24 = ssub.s32 %s16, %s23
      %p25 = scmp.eq.s32.totalorder %s24, 0
      %s27 = sadd.s32 %s26, 1
      %s28 = scalar_select %p25, %s26, %s27
      %p31 = pneg %p25
      %p32 = scmp.eq.s32.totalorder %s16, 1
      %p33 = por %p31, %p32
      %p34 = scmp.ne.s32.totalorder %s26, %s29
      %p35 = scmp.eq.s32.totalorder %s16, 0
      %p36 = por %p34, %p35
      %p37 = scmp.ne.s32.totalorder %s26, %s29
      %p38 = scmp.eq.s32.totalorder %s21, 1
      %p39 = por %p37, %p38
      %p40 = scmp.ne.s32.totalorder %s29, %s30
      %p41 = scmp.eq.s32.totalorder %s21, 0
      %p42 = por %p40, %p41
      %p43 = scmp.ne.s32.totalorder %s29, %s30
      %p44 = scmp.eq.s32.totalorder %s22, 1
      %p45 = por %p43, %p44
      %p47 = scmp.ne.s32.totalorder %s30, %s46
      %p48 = scmp.eq.s32.totalorder %s22, 0
      %p49 = por %p47, %p48
      %s51 = sadd.s32 %s50, 1
      %p54 = scmp.eq.s32.totalorder %s16, 1
      %p55 = scmp.ne.s32.totalorder %s50, %s52
      %p56 = scmp.eq.s32.totalorder %s16, 0
      %p57 = por %p55, %p56
      %p58 = scmp.ne.s32.totalorder %s50, %s52
      %p59 = scmp.eq.s32.totalorder %s21, 1
      %p60 = por %p58, %p59
      %p61 = scmp.ne.s32.totalorder %s52, %s53
      %p62 = scmp.eq.s32.totalorder %s21, 0
      %p63 = por %p61, %p62
      %p64 = scmp.ne.s32.totalorder %s52, %s53
      %p65 = scmp.eq.s32.totalorder %s22, 1
      %p66 = por %p64, %p65
      %p68 = scmp.ne.s32.totalorder %s53, %s67
      %p69 = scmp.eq.s32.totalorder %s22, 0
      %p70 = por %p68, %p69
      %s72 = sadd.s32 %s71, 1
      %p75 = scmp.eq.s32.totalorder %s16, 1
      %p76 = scmp.ne.s32.totalorder %s71, %s73
      %p77 = scmp.eq.s32.totalorder %s16, 0
      %p78 = por %p76, %p77
      %p79 = scmp.ne.s32.totalorder %s71, %s73
      %p80 = scmp.eq.s32.totalorder %s21, 1
      %p81 = por %p79, %p80
      %p82 = scmp.ne.s32.totalorder %s73, %s74
      %p83 = scmp.eq.s32.totalorder %s21, 0
      %p84 = por %p82, %p83
      %p85 = scmp.ne.s32.totalorder %s73, %s74
      %p86 = scmp.eq.s32.totalorder %s22, 1
      %p87 = por %p85, %p86
      %p89 = scmp.ne.s32.totalorder %s74, %s88
      %p90 = scmp.eq.s32.totalorder %s22, 0
      %p91 = por %p89, %p90
      %s92 = ssub.s32 %s16, %s23
      %p93 = scmp.eq.s32.totalorder %s92, 0
      %s95 = sadd.s32 %s94, 1
      %s96 = scalar_select %p93, %s94, %s95
      %p99 = pneg %p93
      %p100 = scmp.eq.s32.totalorder %s16, 1
      %p101 = por %p99, %p100
      %p102 = scmp.ne.s32.totalorder %s94, %s97
      %p103 = scmp.eq.s32.totalorder %s16, 0
      %p104 = por %p102, %p103
      %p105 = scmp.ne.s32.totalorder %s94, %s97
      %p106 = scmp.eq.s32.totalorder %s21, 1
      %p107 = por %p105, %p106
      %p108 = scmp.ne.s32.totalorder %s97, %s98
      %p109 = scmp.eq.s32.totalorder %s21, 0
      %p110 = por %p108, %p109
      %p111 = scmp.ne.s32.totalorder %s97, %s98
      %p112 = scmp.eq.s32.totalorder %s22, 1
      %p113 = por %p111, %p112
      %p115 = scmp.ne.s32.totalorder %s98, %s114
      %p116 = scmp.eq.s32.totalorder %s22, 0
      %p117 = por %p115, %p116
      %p118 = scmp.le.s32.totalorder 1, %s16
      %p119 = scmp.lt.s32.totalorder %s16, 3
      %p120 = pnand %p118, %p119
      %p121 = pneg %p120
      // Predicated region
      $region9: #{tpu_custom_call.1} parent=5 // pred_check
        _
      $region10: #{tpu_custom_call.1} parent=5 // pred_check_branch
        %123 = sbr.rel (%p120) target = $region12
      $region11: #{tpu_custom_call.1} parent=5 // pred_region
        %s124 = ssub.s32 %s16, 1
        // Predicated region
        $region13: #{tpu_custom_call.1} parent=11 // pred_check
          %p125 = pneg %p63
        $region14: #{tpu_custom_call.1} parent=11 // pred_check_branch
          %127 = sbr.rel (%p125) target = $region16
        $region15: #{tpu_custom_call.1} parent=11 // pred_region
          %129 = vsyncadd [#allocation6], 0
          %s130 = sshll.u32 %s1, 4
          %s131 = int_to_ptr.hbm [resolvable:$true] %s130
          %s132 = sshll.u32 [#allocation5], 4
          %s133 = int_to_ptr.vmem [resolvable:$true] %s132
          %138 = dma.hbm_to_vmem [thread:$0]  %s131, 8192, %s133, [#allocation6], 64, 64, 4
        $region16: #{tpu_custom_call.1} parent=11 // pred_fallthru
          _
        // Predicated region
        $region17: #{tpu_custom_call.1} parent=11 // pred_check
          %p139 = pneg %p84
        $region18: #{tpu_custom_call.1} parent=11 // pred_check_branch
          %141 = sbr.rel (%p139) target = $region20
        $region19: #{tpu_custom_call.1} parent=11 // pred_region
          %143 = vsyncadd [#allocation6], 0
          %s145 = sshll.u32 %s2, 4
          %s146 = int_to_ptr.hbm [resolvable:$true] %s145
          %s147 = sshll.u32 [#allocation7], 4
          %s148 = int_to_ptr.vmem [resolvable:$true] %s147
          %150 = dma.hbm_to_vmem [thread:$0]  %s146, 32, %s148, [#allocation6]
        $region20: #{tpu_custom_call.1} parent=11 // pred_fallthru
          _
      $region12: #{tpu_custom_call.1} parent=5 // pred_fallthru
        _
      %p151 = scmp.lt.s32.totalorder %s16, 2
      // Predicated region
      $region21: #{tpu_custom_call.1} parent=5 // pred_check
        %p152 = pneg %p151
      $region22: #{tpu_custom_call.1} parent=5 // pred_check_branch
        %154 = sbr.rel (%p152) target = $region24
      $region23: #{tpu_custom_call.1} parent=5 // pred_region
        // Predicated region
        $region25: #{tpu_custom_call.1} parent=23 // pred_check
          %p155 = pneg %p36
        $region26: #{tpu_custom_call.1} parent=23 // pred_check_branch
          %157 = sbr.rel (%p155) target = $region28
        $region27: #{tpu_custom_call.1} parent=23 // pred_region
          %s158 = sand.u32 %s26, 1
          %s159 = scalar_lea.sflag [#allocation3], %s158
          %s160 = sand.u32 %s26, 1
          %s161 = smul.addr %s160, 512
          %s162 = scalar_lea.vmem [#allocation2], %s161
          %s163 = smul.u32 16, %s16
          %165 = vsyncadd %s159, 0
          %s166 = smul.addr %s163, 8
          %s167 = smul.addr %s166, 4
          %s168 = scalar_lea.hbm %s0, %s167
          %s169 = sshll.u32 %s168, 4
          %s170 = int_to_ptr.hbm [resolvable:$true] %s169
          %s171 = sshll.u32 %s162, 4
          %s172 = int_to_ptr.vmem [resolvable:$true] %s171
          %177 = dma.hbm_to_vmem [thread:$0]  %s170, 8192, %s172, %s159, 512, 512, 32
        $region28: #{tpu_custom_call.1} parent=23 // pred_fallthru
          _
      $region24: #{tpu_custom_call.1} parent=5 // pred_fallthru
        _
      %p178 = scmp.le.s32.totalorder 1, %s16
      %p179 = scmp.lt.s32.totalorder %s16, 3
      %p180 = pnand %p178, %p179
      %p181 = pneg %p180
      // Predicated region
      $region29: #{tpu_custom_call.1} parent=5 // pred_check
        _
      $region30: #{tpu_custom_call.1} parent=5 // pred_check_branch
        %183 = sbr.rel (%p180) target = $region32
      $region31: #{tpu_custom_call.1} parent=5 // pred_region
        %s184 = ssub.s32 %s16, 1
        %s185 = sand.u32 %s29, 1
        %s186 = scalar_lea.sflag [#allocation3], %s185
        %s187 = sand.u32 %s29, 1
        %s188 = smul.addr %s187, 512
        %s189 = scalar_lea.vmem [#allocation2], %s188
        // Predicated region
        $region33: #{tpu_custom_call.1} parent=31 // pred_check
          %p190 = pneg %p42
        $region34: #{tpu_custom_call.1} parent=31 // pred_check_branch
          %192 = sbr.rel (%p190) target = $region36
        $region35: #{tpu_custom_call.1} parent=31 // pred_region
          %194 = dma.done %s186, 8192
        $region36: #{tpu_custom_call.1} parent=31 // pred_fallthru
          _
        // Predicated region
        $region37: #{tpu_custom_call.1} parent=31 // pred_check
          %p195 = pneg %p63
        $region38: #{tpu_custom_call.1} parent=31 // pred_check_branch
          %197 = sbr.rel (%p195) target = $region40
        $region39: #{tpu_custom_call.1} parent=31 // pred_region
          %199 = dma.done [#allocation6], 8192
        $region40: #{tpu_custom_call.1} parent=31 // pred_fallthru
          _
        // Predicated region
        $region41: #{tpu_custom_call.1} parent=31 // pred_check
          %p200 = pneg %p84
        $region42: #{tpu_custom_call.1} parent=31 // pred_check_branch
          %202 = sbr.rel (%p200) target = $region44
        $region43: #{tpu_custom_call.1} parent=31 // pred_region
          %204 = dma.done [#allocation6], 32
        $region44: #{tpu_custom_call.1} parent=31 // pred_fallthru
          _
        %s205 = sand.u32 %s29, 1
        %s206 = scalar_lea.sflag [#allocation3], %s205
        %s207 = sand.u32 %s29, 1
        %s208 = smul.addr %s207, 512
        %s209 = scalar_lea.vmem [#allocation2], %s208
        %p210 = pneg %p42
        %p211 = pneg %p39
        %p212 = pneg %p63
        %p213 = pneg %p60
        %p214 = pneg %p84
        %p215 = pneg %p81
        %p216 = pneg %p110
        %p217 = pneg %p107
        %s218 = sand.u32 %s97, 1
        %s219 = scalar_lea.sflag [#allocation4], %s218
        %s220 = sand.u32 %s97, 1
        %s221 = smul.addr %s220, 128
        %s222 = scalar_lea.vmem [#allocation8], %s221
        %s223 = smul.u32 16, %s21
        %s224 = smul.u32 16, %s21
        %v225 = vld [vmem:[%s189] sm:$0xff]
        %v226 = vld [vmem:[%s189 + $0x8] sm:$0xff]
        %v227 = vld [vmem:[%s189 + $0x10] sm:$0xff]
        %v228 = vld [vmem:[%s189 + $0x18] sm:$0xff]
        %v229 = vld [vmem:[%s189 + $0x20] sm:$0xff]
        %v230 = vld [vmem:[%s189 + $0x28] sm:$0xff]
        %v231 = vld [vmem:[%s189 + $0x30] sm:$0xff]
        %v232 = vld [vmem:[%s189 + $0x38] sm:$0xff]
        %v233 = vld [vmem:[%s189 + $0x40] sm:$0xff]
        %v234 = vld [vmem:[%s189 + $0x48] sm:$0xff]
        %v235 = vld [vmem:[%s189 + $0x50] sm:$0xff]
        %v236 = vld [vmem:[%s189 + $0x58] sm:$0xff]
        %v237 = vld [vmem:[%s189 + $0x60] sm:$0xff]
        %v238 = vld [vmem:[%s189 + $0x68] sm:$0xff]
        %v239 = vld [vmem:[%s189 + $0x70] sm:$0xff]
        %v240 = vld [vmem:[%s189 + $0x78] sm:$0xff]
        %v241 = vld [vmem:[%s189 + $0x80] sm:$0xff]
        %v242 = vld [vmem:[%s189 + $0x88] sm:$0xff]
        %v243 = vld [vmem:[%s189 + $0x90] sm:$0xff]
        %v244 = vld [vmem:[%s189 + $0x98] sm:$0xff]
        %v245 = vld [vmem:[%s189 + $0xa0] sm:$0xff]
        %v246 = vld [vmem:[%s189 + $0xa8] sm:$0xff]
        %v247 = vld [vmem:[%s189 + $0xb0] sm:$0xff]
        %v248 = vld [vmem:[%s189 + $0xb8] sm:$0xff]
        %v249 = vld [vmem:[%s189 + $0xc0] sm:$0xff]
        %v250 = vld [vmem:[%s189 + $0xc8] sm:$0xff]
        %v251 = vld [vmem:[%s189 + $0xd0] sm:$0xff]
        %v252 = vld [vmem:[%s189 + $0xd8] sm:$0xff]
        %v253 = vld [vmem:[%s189 + $0xe0] sm:$0xff]
        %v254 = vld [vmem:[%s189 + $0xe8] sm:$0xff]
        %v255 = vld [vmem:[%s189 + $0xf0] sm:$0xff]
        %v256 = vld [vmem:[%s189 + $0xf8] sm:$0xff]
        %v257 = vld [vmem:[%s189 + $0x100] sm:$0xff]
        %v258 = vld [vmem:[%s189 + $0x108] sm:$0xff]
        %v259 = vld [vmem:[%s189 + $0x110] sm:$0xff]
        %v260 = vld [vmem:[%s189 + $0x118] sm:$0xff]
        %v261 = vld [vmem:[%s189 + $0x120] sm:$0xff]
        %v262 = vld [vmem:[%s189 + $0x128] sm:$0xff]
        %v263 = vld [vmem:[%s189 + $0x130] sm:$0xff]
        %v264 = vld [vmem:[%s189 + $0x138] sm:$0xff]
        %v265 = vld [vmem:[%s189 + $0x140] sm:$0xff]
        %v266 = vld [vmem:[%s189 + $0x148] sm:$0xff]
        %v267 = vld [vmem:[%s189 + $0x150] sm:$0xff]
        %v268 = vld [vmem:[%s189 + $0x158] sm:$0xff]
        %v269 = vld [vmem:[%s189 + $0x160] sm:$0xff]
        %v270 = vld [vmem:[%s189 + $0x168] sm:$0xff]
        %v271 = vld [vmem:[%s189 + $0x170] sm:$0xff]
        %v272 = vld [vmem:[%s189 + $0x178] sm:$0xff]
        %v273 = vld [vmem:[%s189 + $0x180] sm:$0xff]
        %v274 = vld [vmem:[%s189 + $0x188] sm:$0xff]
        %v275 = vld [vmem:[%s189 + $0x190] sm:$0xff]
        %v276 = vld [vmem:[%s189 + $0x198] sm:$0xff]
        %v277 = vld [vmem:[%s189 + $0x1a0] sm:$0xff]
        %v278 = vld [vmem:[%s189 + $0x1a8] sm:$0xff]
        %v279 = vld [vmem:[%s189 + $0x1b0] sm:$0xff]
        %v280 = vld [vmem:[%s189 + $0x1b8] sm:$0xff]
        %v281 = vld [vmem:[%s189 + $0x1c0] sm:$0xff]
        %v282 = vld [vmem:[%s189 + $0x1c8] sm:$0xff]
        %v283 = vld [vmem:[%s189 + $0x1d0] sm:$0xff]
        %v284 = vld [vmem:[%s189 + $0x1d8] sm:$0xff]
        %v285 = vld [vmem:[%s189 + $0x1e0] sm:$0xff]
        %v286 = vld [vmem:[%s189 + $0x1e8] sm:$0xff]
        %v287 = vld [vmem:[%s189 + $0x1f0] sm:$0xff]
        %v288 = vld [vmem:[%s189 + $0x1f8] sm:$0xff]
        %v289 = vld [vmem:[#allocation5] sm:$0xf]
        %v290 = vld [vmem:[#allocation5 + $0x4] sm:$0xf]
        %v291 = vld [vmem:[#allocation5 + $0x8] sm:$0xf]
        %v292 = vld [vmem:[#allocation5 + $0xc] sm:$0xf]
        %v293 = vld [vmem:[#allocation5 + $0x10] sm:$0xf]
        %v294 = vld [vmem:[#allocation5 + $0x14] sm:$0xf]
        %v295 = vld [vmem:[#allocation5 + $0x18] sm:$0xf]
        %v296 = vld [vmem:[#allocation5 + $0x1c] sm:$0xf]
        %v297 = vld [vmem:[#allocation5 + $0x20] sm:$0xf]
        %v298 = vld [vmem:[#allocation5 + $0x24] sm:$0xf]
        %v299 = vld [vmem:[#allocation5 + $0x28] sm:$0xf]
        %v300 = vld [vmem:[#allocation5 + $0x2c] sm:$0xf]
        %v301 = vld [vmem:[#allocation5 + $0x30] sm:$0xf]
        %v302 = vld [vmem:[#allocation5 + $0x34] sm:$0xf]
        %v303 = vld [vmem:[#allocation5 + $0x38] sm:$0xf]
        %v304 = vld [vmem:[#allocation5 + $0x3c] sm:$0xf]
        %v305 = vld [vmem:[#allocation5 + $0x40] sm:$0xf]
        %v306 = vld [vmem:[#allocation5 + $0x44] sm:$0xf]
        %v307 = vld [vmem:[#allocation5 + $0x48] sm:$0xf]
        %v308 = vld [vmem:[#allocation5 + $0x4c] sm:$0xf]
        %v309 = vld [vmem:[#allocation5 + $0x50] sm:$0xf]
        %v310 = vld [vmem:[#allocation5 + $0x54] sm:$0xf]
        %v311 = vld [vmem:[#allocation5 + $0x58] sm:$0xf]
        %v312 = vld [vmem:[#allocation5 + $0x5c] sm:$0xf]
        %v313 = vld [vmem:[#allocation5 + $0x60] sm:$0xf]
        %v314 = vld [vmem:[#allocation5 + $0x64] sm:$0xf]
        %v315 = vld [vmem:[#allocation5 + $0x68] sm:$0xf]
        %v316 = vld [vmem:[#allocation5 + $0x6c] sm:$0xf]
        %v317 = vld [vmem:[#allocation5 + $0x70] sm:$0xf]
        %v318 = vld [vmem:[#allocation5 + $0x74] sm:$0xf]
        %v319 = vld [vmem:[#allocation5 + $0x78] sm:$0xf]
        %v320 = vld [vmem:[#allocation5 + $0x7c] sm:$0xf]
        %v321 = vld [vmem:[#allocation5 + $0x80] sm:$0xf]
        %v322 = vld [vmem:[#allocation5 + $0x84] sm:$0xf]
        %v323 = vld [vmem:[#allocation5 + $0x88] sm:$0xf]
        %v324 = vld [vmem:[#allocation5 + $0x8c] sm:$0xf]
        %v325 = vld [vmem:[#allocation5 + $0x90] sm:$0xf]
        %v326 = vld [vmem:[#allocation5 + $0x94] sm:$0xf]
        %v327 = vld [vmem:[#allocation5 + $0x98] sm:$0xf]
        %v328 = vld [vmem:[#allocation5 + $0x9c] sm:$0xf]
        %v329 = vld [vmem:[#allocation5 + $0xa0] sm:$0xf]
        %v330 = vld [vmem:[#allocation5 + $0xa4] sm:$0xf]
        %v331 = vld [vmem:[#allocation5 + $0xa8] sm:$0xf]
        %v332 = vld [vmem:[#allocation5 + $0xac] sm:$0xf]
        %v333 = vld [vmem:[#allocation5 + $0xb0] sm:$0xf]
        %v334 = vld [vmem:[#allocation5 + $0xb4] sm:$0xf]
        %v335 = vld [vmem:[#allocation5 + $0xb8] sm:$0xf]
        %v336 = vld [vmem:[#allocation5 + $0xbc] sm:$0xf]
        %v337 = vld [vmem:[#allocation5 + $0xc0] sm:$0xf]
        %v338 = vld [vmem:[#allocation5 + $0xc4] sm:$0xf]
        %v339 = vld [vmem:[#allocation5 + $0xc8] sm:$0xf]
        %v340 = vld [vmem:[#allocation5 + $0xcc] sm:$0xf]
        %v341 = vld [vmem:[#allocation5 + $0xd0] sm:$0xf]
        %v342 = vld [vmem:[#allocation5 + $0xd4] sm:$0xf]
        %v343 = vld [vmem:[#allocation5 + $0xd8] sm:$0xf]
        %v344 = vld [vmem:[#allocation5 + $0xdc] sm:$0xf]
        %v345 = vld [vmem:[#allocation5 + $0xe0] sm:$0xf]
        %v346 = vld [vmem:[#allocation5 + $0xe4] sm:$0xf]
        %v347 = vld [vmem:[#allocation5 + $0xe8] sm:$0xf]
        %v348 = vld [vmem:[#allocation5 + $0xec] sm:$0xf]
        %v349 = vld [vmem:[#allocation5 + $0xf0] sm:$0xf]
        %v350 = vld [vmem:[#allocation5 + $0xf4] sm:$0xf]
        %v351 = vld [vmem:[#allocation5 + $0xf8] sm:$0xf]
        %v352 = vld [vmem:[#allocation5 + $0xfc] sm:$0xf]
        %v353 = vld [vmem:[#allocation5 + $0x100] sm:$0xf]
        %v354 = vld [vmem:[#allocation5 + $0x104] sm:$0xf]
        %v355 = vld [vmem:[#allocation5 + $0x108] sm:$0xf]
        %v356 = vld [vmem:[#allocation5 + $0x10c] sm:$0xf]
        %v357 = vld [vmem:[#allocation5 + $0x110] sm:$0xf]
        %v358 = vld [vmem:[#allocation5 + $0x114] sm:$0xf]
        %v359 = vld [vmem:[#allocation5 + $0x118] sm:$0xf]
        %v360 = vld [vmem:[#allocation5 + $0x11c] sm:$0xf]
        %v361 = vld [vmem:[#allocation5 + $0x120] sm:$0xf]
        %v362 = vld [vmem:[#allocation5 + $0x124] sm:$0xf]
        %v363 = vld [vmem:[#allocation5 + $0x128] sm:$0xf]
        %v364 = vld [vmem:[#allocation5 + $0x12c] sm:$0xf]
        %v365 = vld [vmem:[#allocation5 + $0x130] sm:$0xf]
        %v366 = vld [vmem:[#allocation5 + $0x134] sm:$0xf]
        %v367 = vld [vmem:[#allocation5 + $0x138] sm:$0xf]
        %v368 = vld [vmem:[#allocation5 + $0x13c] sm:$0xf]
        %v369 = vld [vmem:[#allocation5 + $0x140] sm:$0xf]
        %v370 = vld [vmem:[#allocation5 + $0x144] sm:$0xf]
        %v371 = vld [vmem:[#allocation5 + $0x148] sm:$0xf]
        %v372 = vld [vmem:[#allocation5 + $0x14c] sm:$0xf]
        %v373 = vld [vmem:[#allocation5 + $0x150] sm:$0xf]
        %v374 = vld [vmem:[#allocation5 + $0x154] sm:$0xf]
        %v375 = vld [vmem:[#allocation5 + $0x158] sm:$0xf]
        %v376 = vld [vmem:[#allocation5 + $0x15c] sm:$0xf]
        %v377 = vld [vmem:[#allocation5 + $0x160] sm:$0xf]
        %v378 = vld [vmem:[#allocation5 + $0x164] sm:$0xf]
        %v379 = vld [vmem:[#allocation5 + $0x168] sm:$0xf]
        %v380 = vld [vmem:[#allocation5 + $0x16c] sm:$0xf]
        %v381 = vld [vmem:[#allocation5 + $0x170] sm:$0xf]
        %v382 = vld [vmem:[#allocation5 + $0x174] sm:$0xf]
        %v383 = vld [vmem:[#allocation5 + $0x178] sm:$0xf]
        %v384 = vld [vmem:[#allocation5 + $0x17c] sm:$0xf]
        %v385 = vld [vmem:[#allocation5 + $0x180] sm:$0xf]
        %v386 = vld [vmem:[#allocation5 + $0x184] sm:$0xf]
        %v387 = vld [vmem:[#allocation5 + $0x188] sm:$0xf]
        %v388 = vld [vmem:[#allocation5 + $0x18c] sm:$0xf]
        %v389 = vld [vmem:[#allocation5 + $0x190] sm:$0xf]
        %v390 = vld [vmem:[#allocation5 + $0x194] sm:$0xf]
        %v391 = vld [vmem:[#allocation5 + $0x198] sm:$0xf]
        %v392 = vld [vmem:[#allocation5 + $0x19c] sm:$0xf]
        %v393 = vld [vmem:[#allocation5 + $0x1a0] sm:$0xf]
        %v394 = vld [vmem:[#allocation5 + $0x1a4] sm:$0xf]
        %v395 = vld [vmem:[#allocation5 + $0x1a8] sm:$0xf]
        %v396 = vld [vmem:[#allocation5 + $0x1ac] sm:$0xf]
        %v397 = vld [vmem:[#allocation5 + $0x1b0] sm:$0xf]
        %v398 = vld [vmem:[#allocation5 + $0x1b4] sm:$0xf]
        %v399 = vld [vmem:[#allocation5 + $0x1b8] sm:$0xf]
        %v400 = vld [vmem:[#allocation5 + $0x1bc] sm:$0xf]
        %v401 = vld [vmem:[#allocation5 + $0x1c0] sm:$0xf]
        %v402 = vld [vmem:[#allocation5 + $0x1c4] sm:$0xf]
        %v403 = vld [vmem:[#allocation5 + $0x1c8] sm:$0xf]
        %v404 = vld [vmem:[#allocation5 + $0x1cc] sm:$0xf]
        %v405 = vld [vmem:[#allocation5 + $0x1d0] sm:$0xf]
        %v406 = vld [vmem:[#allocation5 + $0x1d4] sm:$0xf]
        %v407 = vld [vmem:[#allocation5 + $0x1d8] sm:$0xf]
        %v408 = vld [vmem:[#allocation5 + $0x1dc] sm:$0xf]
        %v409 = vld [vmem:[#allocation5 + $0x1e0] sm:$0xf]
        %v410 = vld [vmem:[#allocation5 + $0x1e4] sm:$0xf]
        %v411 = vld [vmem:[#allocation5 + $0x1e8] sm:$0xf]
        %v412 = vld [vmem:[#allocation5 + $0x1ec] sm:$0xf]
        %v413 = vld [vmem:[#allocation5 + $0x1f0] sm:$0xf]
        %v414 = vld [vmem:[#allocation5 + $0x1f4] sm:$0xf]
        %v415 = vld [vmem:[#allocation5 + $0x1f8] sm:$0xf]
        %v416 = vld [vmem:[#allocation5 + $0x1fc] sm:$0xf]
        %v417 = vld [vmem:[#allocation7] sm:$0x1]
        %v418 = vperm.slane %v417, 0
        %v483 = vunpack.c.l.b16 %v225
        %v484 = vunpack.c.h.b16 %v225
        %v485 = vunpack.c.l.b16 %v226
        %v486 = vunpack.c.h.b16 %v226
        %v487 = vunpack.c.l.b16 %v227
        %v488 = vunpack.c.h.b16 %v227
        %v489 = vunpack.c.l.b16 %v228
        %v490 = vunpack.c.h.b16 %v228
        %v491 = vunpack.c.l.b16 %v229
        %v492 = vunpack.c.h.b16 %v229
        %v493 = vunpack.c.l.b16 %v230
        %v494 = vunpack.c.h.b16 %v230
        %v495 = vunpack.c.l.b16 %v231
        %v496 = vunpack.c.h.b16 %v231
        %v497 = vunpack.c.l.b16 %v232
        %v498 = vunpack.c.h.b16 %v232
        %v499 = vunpack.c.l.b16 %v233
        %v500 = vunpack.c.h.b16 %v233
        %v501 = vunpack.c.l.b16 %v234
        %v502 = vunpack.c.h.b16 %v234
        %v503 = vunpack.c.l.b16 %v235
        %v504 = vunpack.c.h.b16 %v235
        %v505 = vunpack.c.l.b16 %v236
        %v506 = vunpack.c.h.b16 %v236
        %v507 = vunpack.c.l.b16 %v237
        %v508 = vunpack.c.h.b16 %v237
        %v509 = vunpack.c.l.b16 %v238
        %v510 = vunpack.c.h.b16 %v238
        %v511 = vunpack.c.l.b16 %v239
        %v512 = vunpack.c.h.b16 %v239
        %v513 = vunpack.c.l.b16 %v240
        %v514 = vunpack.c.h.b16 %v240
        %v515 = vunpack.c.l.b16 %v241
        %v516 = vunpack.c.h.b16 %v241
        %v517 = vunpack.c.l.b16 %v242
        %v518 = vunpack.c.h.b16 %v242
        %v519 = vunpack.c.l.b16 %v243
        %v520 = vunpack.c.h.b16 %v243
        %v521 = vunpack.c.l.b16 %v244
        %v522 = vunpack.c.h.b16 %v244
        %v523 = vunpack.c.l.b16 %v245
        %v524 = vunpack.c.h.b16 %v245
        %v525 = vunpack.c.l.b16 %v246
        %v526 = vunpack.c.h.b16 %v246
        %v527 = vunpack.c.l.b16 %v247
        %v528 = vunpack.c.h.b16 %v247
        %v529 = vunpack.c.l.b16 %v248
        %v530 = vunpack.c.h.b16 %v248
        %v531 = vunpack.c.l.b16 %v249
        %v532 = vunpack.c.h.b16 %v249
        %v533 = vunpack.c.l.b16 %v250
        %v534 = vunpack.c.h.b16 %v250
        %v535 = vunpack.c.l.b16 %v251
        %v536 = vunpack.c.h.b16 %v251
        %v537 = vunpack.c.l.b16 %v252
        %v538 = vunpack.c.h.b16 %v252
        %v539 = vunpack.c.l.b16 %v253
        %v540 = vunpack.c.h.b16 %v253
        %v541 = vunpack.c.l.b16 %v254
        %v542 = vunpack.c.h.b16 %v254
        %v543 = vunpack.c.l.b16 %v255
        %v544 = vunpack.c.h.b16 %v255
        %v545 = vunpack.c.l.b16 %v256
        %v546 = vunpack.c.h.b16 %v256
        %v547 = vunpack.c.l.b16 %v257
        %v548 = vunpack.c.h.b16 %v257
        %v549 = vunpack.c.l.b16 %v258
        %v550 = vunpack.c.h.b16 %v258
        %v551 = vunpack.c.l.b16 %v259
        %v552 = vunpack.c.h.b16 %v259
        %v553 = vunpack.c.l.b16 %v260
        %v554 = vunpack.c.h.b16 %v260
        %v555 = vunpack.c.l.b16 %v261
        %v556 = vunpack.c.h.b16 %v261
        %v557 = vunpack.c.l.b16 %v262
        %v558 = vunpack.c.h.b16 %v262
        %v559 = vunpack.c.l.b16 %v263
        %v560 = vunpack.c.h.b16 %v263
        %v561 = vunpack.c.l.b16 %v264
        %v562 = vunpack.c.h.b16 %v264
        %v563 = vunpack.c.l.b16 %v265
        %v564 = vunpack.c.h.b16 %v265
        %v565 = vunpack.c.l.b16 %v266
        %v566 = vunpack.c.h.b16 %v266
        %v567 = vunpack.c.l.b16 %v267
        %v568 = vunpack.c.h.b16 %v267
        %v569 = vunpack.c.l.b16 %v268
        %v570 = vunpack.c.h.b16 %v268
        %v571 = vunpack.c.l.b16 %v269
        %v572 = vunpack.c.h.b16 %v269
        %v573 = vunpack.c.l.b16 %v270
        %v574 = vunpack.c.h.b16 %v270
        %v575 = vunpack.c.l.b16 %v271
        %v576 = vunpack.c.h.b16 %v271
        %v577 = vunpack.c.l.b16 %v272
        %v578 = vunpack.c.h.b16 %v272
        %v579 = vunpack.c.l.b16 %v273
        %v580 = vunpack.c.h.b16 %v273
        %v581 = vunpack.c.l.b16 %v274
        %v582 = vunpack.c.h.b16 %v274
        %v583 = vunpack.c.l.b16 %v275
        %v584 = vunpack.c.h.b16 %v275
        %v585 = vunpack.c.l.b16 %v276
        %v586 = vunpack.c.h.b16 %v276
        %v587 = vunpack.c.l.b16 %v277
        %v588 = vunpack.c.h.b16 %v277
        %v589 = vunpack.c.l.b16 %v278
        %v590 = vunpack.c.h.b16 %v278
        %v591 = vunpack.c.l.b16 %v279
        %v592 = vunpack.c.h.b16 %v279
        %v593 = vunpack.c.l.b16 %v280
        %v594 = vunpack.c.h.b16 %v280
        %v595 = vunpack.c.l.b16 %v281
        %v596 = vunpack.c.h.b16 %v281
        %v597 = vunpack.c.l.b16 %v282
        %v598 = vunpack.c.h.b16 %v282
        %v599 = vunpack.c.l.b16 %v283
        %v600 = vunpack.c.h.b16 %v283
        %v601 = vunpack.c.l.b16 %v284
        %v602 = vunpack.c.h.b16 %v284
        %v603 = vunpack.c.l.b16 %v285
        %v604 = vunpack.c.h.b16 %v285
        %v605 = vunpack.c.l.b16 %v286
        %v606 = vunpack.c.h.b16 %v286
        %v607 = vunpack.c.l.b16 %v287
        %v608 = vunpack.c.h.b16 %v287
        %v609 = vunpack.c.l.b16 %v288
        %v610 = vunpack.c.h.b16 %v288
        %v611 = vpack.c.b16 %v491, %v483
        %v612 = vpack.c.b16 %v492, %v484
        %v613 = vpack.c.b16 %v493, %v485
        %v614 = vpack.c.b16 %v494, %v486
        %v615 = vpack.c.b16 %v495, %v487
        %v616 = vpack.c.b16 %v496, %v488
        %v617 = vpack.c.b16 %v497, %v489
        %v618 = vpack.c.b16 %v498, %v490
        %v619 = vpack.c.b16 %v507, %v499
        %v620 = vpack.c.b16 %v508, %v500
        %v621 = vpack.c.b16 %v509, %v501
        %v622 = vpack.c.b16 %v510, %v502
        %v623 = vpack.c.b16 %v511, %v503
        %v624 = vpack.c.b16 %v512, %v504
        %v625 = vpack.c.b16 %v513, %v505
        %v626 = vpack.c.b16 %v514, %v506
        %v627 = vpack.c.b16 %v523, %v515
        %v628 = vpack.c.b16 %v524, %v516
        %v629 = vpack.c.b16 %v525, %v517
        %v630 = vpack.c.b16 %v526, %v518
        %v631 = vpack.c.b16 %v527, %v519
        %v632 = vpack.c.b16 %v528, %v520
        %v633 = vpack.c.b16 %v529, %v521
        %v634 = vpack.c.b16 %v530, %v522
        %v635 = vpack.c.b16 %v539, %v531
        %v636 = vpack.c.b16 %v540, %v532
        %v637 = vpack.c.b16 %v541, %v533
        %v638 = vpack.c.b16 %v542, %v534
        %v639 = vpack.c.b16 %v543, %v535
        %v640 = vpack.c.b16 %v544, %v536
        %v641 = vpack.c.b16 %v545, %v537
        %v642 = vpack.c.b16 %v546, %v538
        %v643 = vpack.c.b16 %v555, %v547
        %v644 = vpack.c.b16 %v556, %v548
        %v645 = vpack.c.b16 %v557, %v549
        %v646 = vpack.c.b16 %v558, %v550
        %v647 = vpack.c.b16 %v559, %v551
        %v648 = vpack.c.b16 %v560, %v552
        %v649 = vpack.c.b16 %v561, %v553
        %v650 = vpack.c.b16 %v562, %v554
        %v651 = vpack.c.b16 %v571, %v563
        %v652 = vpack.c.b16 %v572, %v564
        %v653 = vpack.c.b16 %v573, %v565
        %v654 = vpack.c.b16 %v574, %v566
        %v655 = vpack.c.b16 %v575, %v567
        %v656 = vpack.c.b16 %v576, %v568
        %v657 = vpack.c.b16 %v577, %v569
        %v658 = vpack.c.b16 %v578, %v570
        %v659 = vpack.c.b16 %v587, %v579
        %v660 = vpack.c.b16 %v588, %v580
        %v661 = vpack.c.b16 %v589, %v581
        %v662 = vpack.c.b16 %v590, %v582
        %v663 = vpack.c.b16 %v591, %v583
        %v664 = vpack.c.b16 %v592, %v584
        %v665 = vpack.c.b16 %v593, %v585
        %v666 = vpack.c.b16 %v594, %v586
        %v667 = vpack.c.b16 %v603, %v595
        %v668 = vpack.c.b16 %v604, %v596
        %v669 = vpack.c.b16 %v605, %v597
        %v670 = vpack.c.b16 %v606, %v598
        %v671 = vpack.c.b16 %v607, %v599
        %v672 = vpack.c.b16 %v608, %v600
        %v673 = vpack.c.b16 %v609, %v601
        %v674 = vpack.c.b16 %v610, %v602
        %v867 = vunpack.c.l.b16 %v289
        %v868 = vunpack.c.l.b16 %v290
        %v869 = vunpack.c.l.b16 %v291
        %v870 = vunpack.c.l.b16 %v292
        %v871 = vunpack.c.l.b16 %v293
        %v872 = vunpack.c.l.b16 %v294
        %v873 = vunpack.c.l.b16 %v295
        %v874 = vunpack.c.l.b16 %v296
        %v875 = vunpack.c.l.b16 %v297
        %v876 = vunpack.c.l.b16 %v298
        %v877 = vunpack.c.l.b16 %v299
        %v878 = vunpack.c.l.b16 %v300
        %v879 = vunpack.c.l.b16 %v301
        %v880 = vunpack.c.l.b16 %v302
        %v881 = vunpack.c.l.b16 %v303
        %v882 = vunpack.c.l.b16 %v304
        %v883 = vunpack.c.l.b16 %v305
        %v884 = vunpack.c.l.b16 %v306
        %v885 = vunpack.c.l.b16 %v307
        %v886 = vunpack.c.l.b16 %v308
        %v887 = vunpack.c.l.b16 %v309
        %v888 = vunpack.c.l.b16 %v310
        %v889 = vunpack.c.l.b16 %v311
        %v890 = vunpack.c.l.b16 %v312
        %v891 = vunpack.c.l.b16 %v313
        %v892 = vunpack.c.l.b16 %v314
        %v893 = vunpack.c.l.b16 %v315
        %v894 = vunpack.c.l.b16 %v316
        %v895 = vunpack.c.l.b16 %v317
        %v896 = vunpack.c.l.b16 %v318
        %v897 = vunpack.c.l.b16 %v319
        %v898 = vunpack.c.l.b16 %v320
        %v899 = vunpack.c.l.b16 %v321
        %v900 = vunpack.c.l.b16 %v322
        %v901 = vunpack.c.l.b16 %v323
        %v902 = vunpack.c.l.b16 %v324
        %v903 = vunpack.c.l.b16 %v325
        %v904 = vunpack.c.l.b16 %v326
        %v905 = vunpack.c.l.b16 %v327
        %v906 = vunpack.c.l.b16 %v328
        %v907 = vunpack.c.l.b16 %v329
        %v908 = vunpack.c.l.b16 %v330
        %v909 = vunpack.c.l.b16 %v331
        %v910 = vunpack.c.l.b16 %v332
        %v911 = vunpack.c.l.b16 %v333
        %v912 = vunpack.c.l.b16 %v334
        %v913 = vunpack.c.l.b16 %v335
        %v914 = vunpack.c.l.b16 %v336
        %v915 = vunpack.c.l.b16 %v337
        %v916 = vunpack.c.l.b16 %v338
        %v917 = vunpack.c.l.b16 %v339
        %v918 = vunpack.c.l.b16 %v340
        %v919 = vunpack.c.l.b16 %v341
        %v920 = vunpack.c.l.b16 %v342
        %v921 = vunpack.c.l.b16 %v343
        %v922 = vunpack.c.l.b16 %v344
        %v923 = vunpack.c.l.b16 %v345
        %v924 = vunpack.c.l.b16 %v346
        %v925 = vunpack.c.l.b16 %v347
        %v926 = vunpack.c.l.b16 %v348
        %v927 = vunpack.c.l.b16 %v349
        %v928 = vunpack.c.l.b16 %v350
        %v929 = vunpack.c.l.b16 %v351
        %v930 = vunpack.c.l.b16 %v352
        %v931 = vunpack.c.l.b16 %v353
        %v932 = vunpack.c.l.b16 %v354
        %v933 = vunpack.c.l.b16 %v355
        %v934 = vunpack.c.l.b16 %v356
        %v935 = vunpack.c.l.b16 %v357
        %v936 = vunpack.c.l.b16 %v358
        %v937 = vunpack.c.l.b16 %v359
        %v938 = vunpack.c.l.b16 %v360
        %v939 = vunpack.c.l.b16 %v361
        %v940 = vunpack.c.l.b16 %v362
        %v941 = vunpack.c.l.b16 %v363
        %v942 = vunpack.c.l.b16 %v364
        %v943 = vunpack.c.l.b16 %v365
        %v944 = vunpack.c.l.b16 %v366
        %v945 = vunpack.c.l.b16 %v367
        %v946 = vunpack.c.l.b16 %v368
        %v947 = vunpack.c.l.b16 %v369
        %v948 = vunpack.c.l.b16 %v370
        %v949 = vunpack.c.l.b16 %v371
        %v950 = vunpack.c.l.b16 %v372
        %v951 = vunpack.c.l.b16 %v373
        %v952 = vunpack.c.l.b16 %v374
        %v953 = vunpack.c.l.b16 %v375
        %v954 = vunpack.c.l.b16 %v376
        %v955 = vunpack.c.l.b16 %v377
        %v956 = vunpack.c.l.b16 %v378
        %v957 = vunpack.c.l.b16 %v379
        %v958 = vunpack.c.l.b16 %v380
        %v959 = vunpack.c.l.b16 %v381
        %v960 = vunpack.c.l.b16 %v382
        %v961 = vunpack.c.l.b16 %v383
        %v962 = vunpack.c.l.b16 %v384
        %v963 = vunpack.c.l.b16 %v385
        %v964 = vunpack.c.l.b16 %v386
        %v965 = vunpack.c.l.b16 %v387
        %v966 = vunpack.c.l.b16 %v388
        %v967 = vunpack.c.l.b16 %v389
        %v968 = vunpack.c.l.b16 %v390
        %v969 = vunpack.c.l.b16 %v391
        %v970 = vunpack.c.l.b16 %v392
        %v971 = vunpack.c.l.b16 %v393
        %v972 = vunpack.c.l.b16 %v394
        %v973 = vunpack.c.l.b16 %v395
        %v974 = vunpack.c.l.b16 %v396
        %v975 = vunpack.c.l.b16 %v397
        %v976 = vunpack.c.l.b16 %v398
        %v977 = vunpack.c.l.b16 %v399
        %v978 = vunpack.c.l.b16 %v400
        %v979 = vunpack.c.l.b16 %v401
        %v980 = vunpack.c.l.b16 %v402
        %v981 = vunpack.c.l.b16 %v403
        %v982 = vunpack.c.l.b16 %v404
        %v983 = vunpack.c.l.b16 %v405
        %v984 = vunpack.c.l.b16 %v406
        %v985 = vunpack.c.l.b16 %v407
        %v986 = vunpack.c.l.b16 %v408
        %v987 = vunpack.c.l.b16 %v409
        %v988 = vunpack.c.l.b16 %v410
        %v989 = vunpack.c.l.b16 %v411
        %v990 = vunpack.c.l.b16 %v412
        %v991 = vunpack.c.l.b16 %v413
        %v992 = vunpack.c.l.b16 %v414
        %v993 = vunpack.c.l.b16 %v415
        %v994 = vunpack.c.l.b16 %v416
        %v995 = vpack.c.b16 %v868, %v867
        %v996 = vpack.c.b16 %v870, %v869
        %v997 = vpack.c.b16 %v872, %v871
        %v998 = vpack.c.b16 %v874, %v873
        %v999 = vpack.c.b16 %v876, %v875
        %v1000 = vpack.c.b16 %v878, %v877
        %v1001 = vpack.c.b16 %v880, %v879
        %v1002 = vpack.c.b16 %v882, %v881
        %v1003 = vpack.c.b16 %v884, %v883
        %v1004 = vpack.c.b16 %v886, %v885
        %v1005 = vpack.c.b16 %v888, %v887
        %v1006 = vpack.c.b16 %v890, %v889
        %v1007 = vpack.c.b16 %v892, %v891
        %v1008 = vpack.c.b16 %v894, %v893
        %v1009 = vpack.c.b16 %v896, %v895
        %v1010 = vpack.c.b16 %v898, %v897
        %v1011 = vpack.c.b16 %v900, %v899
        %v1012 = vpack.c.b16 %v902, %v901
        %v1013 = vpack.c.b16 %v904, %v903
        %v1014 = vpack.c.b16 %v906, %v905
        %v1015 = vpack.c.b16 %v908, %v907
        %v1016 = vpack.c.b16 %v910, %v909
        %v1017 = vpack.c.b16 %v912, %v911
        %v1018 = vpack.c.b16 %v914, %v913
        %v1019 = vpack.c.b16 %v916, %v915
        %v1020 = vpack.c.b16 %v918, %v917
        %v1021 = vpack.c.b16 %v920, %v919
        %v1022 = vpack.c.b16 %v922, %v921
        %v1023 = vpack.c.b16 %v924, %v923
        %v1024 = vpack.c.b16 %v926, %v925
        %v1025 = vpack.c.b16 %v928, %v927
        %v1026 = vpack.c.b16 %v930, %v929
        %v1027 = vpack.c.b16 %v932, %v931
        %v1028 = vpack.c.b16 %v934, %v933
        %v1029 = vpack.c.b16 %v936, %v935
        %v1030 = vpack.c.b16 %v938, %v937
        %v1031 = vpack.c.b16 %v940, %v939
        %v1032 = vpack.c.b16 %v942, %v941
        %v1033 = vpack.c.b16 %v944, %v943
        %v1034 = vpack.c.b16 %v946, %v945
        %v1035 = vpack.c.b16 %v948, %v947
        %v1036 = vpack.c.b16 %v950, %v949
        %v1037 = vpack.c.b16 %v952, %v951
        %v1038 = vpack.c.b16 %v954, %v953
        %v1039 = vpack.c.b16 %v956, %v955
        %v1040 = vpack.c.b16 %v958, %v957
        %v1041 = vpack.c.b16 %v960, %v959
        %v1042 = vpack.c.b16 %v962, %v961
        %v1043 = vpack.c.b16 %v964, %v963
        %v1044 = vpack.c.b16 %v966, %v965
        %v1045 = vpack.c.b16 %v968, %v967
        %v1046 = vpack.c.b16 %v970, %v969
        %v1047 = vpack.c.b16 %v972, %v971
        %v1048 = vpack.c.b16 %v974, %v973
        %v1049 = vpack.c.b16 %v976, %v975
        %v1050 = vpack.c.b16 %v978, %v977
        %v1051 = vpack.c.b16 %v980, %v979
        %v1052 = vpack.c.b16 %v982, %v981
        %v1053 = vpack.c.b16 %v984, %v983
        %v1054 = vpack.c.b16 %v986, %v985
        %v1055 = vpack.c.b16 %v988, %v987
        %v1056 = vpack.c.b16 %v990, %v989
        %v1057 = vpack.c.b16 %v992, %v991
        %v1058 = vpack.c.b16 %v994, %v993
        %1123 = vmatpush.bf16.msra.mxu0 %v1002
        %1124 = vmatpush.bf16.msra.mxu0 %v1001
        %1125 = vmatpush.bf16.msra.mxu0 %v1000
        %1126 = vmatpush.bf16.msra.mxu0 %v999
        %1127 = vmatpush.bf16.msra.mxu0 %v998
        %1128 = vmatpush.bf16.msra.mxu0 %v997
        %1129 = vmatpush.bf16.msra.mxu0 %v996
        %1130 = vmatpush.bf16.msra.mxu0 %v995
        %1131 = vmatmul.bf16.gmra.mxu0 %v611
        %v1132 = vpop.f32.mrf.mxu0
        %v1133 = vadd.f32 %v418, %v1132
        %v1134 = vpop.f32.mrf.mxu0
        %v1135 = vadd.f32 %v418, %v1134
        %1136 = vmatmul.bf16.gmra.mxu0 %v619
        %v1137 = vpop.f32.mrf.mxu0
        %v1138 = vadd.f32 %v418, %v1137
        %v1139 = vpop.f32.mrf.mxu0
        %v1140 = vadd.f32 %v418, %v1139
        %1141 = vmatmul.bf16.gmra.mxu0 %v627
        %v1142 = vpop.f32.mrf.mxu0
        %v1143 = vadd.f32 %v418, %v1142
        %v1144 = vpop.f32.mrf.mxu0
        %v1145 = vadd.f32 %v418, %v1144
        %1146 = vmatmul.bf16.gmra.mxu0 %v635
        %v1147 = vpop.f32.mrf.mxu0
        %v1148 = vadd.f32 %v418, %v1147
        %v1149 = vpop.f32.mrf.mxu0
        %v1150 = vadd.f32 %v418, %v1149
        %1151 = vmatmul.bf16.gmra.mxu0 %v643
        %v1152 = vpop.f32.mrf.mxu0
        %v1153 = vadd.f32 %v418, %v1152
        %v1154 = vpop.f32.mrf.mxu0
        %v1155 = vadd.f32 %v418, %v1154
        %1156 = vmatmul.bf16.gmra.mxu0 %v651
        %v1157 = vpop.f32.mrf.mxu0
        %v1158 = vadd.f32 %v418, %v1157
        %v1159 = vpop.f32.mrf.mxu0
        %v1160 = vadd.f32 %v418, %v1159
        %1161 = vmatmul.bf16.gmra.mxu0 %v659
        %v1162 = vpop.f32.mrf.mxu0
        %v1163 = vadd.f32 %v418, %v1162
        %v1164 = vpop.f32.mrf.mxu0
        %v1165 = vadd.f32 %v418, %v1164
        %1166 = vmatmul.bf16.gmra.mxu0 %v667
        %v1167 = vpop.f32.mrf.mxu0
        %v1168 = vadd.f32 %v418, %v1167
        %v1169 = vpop.f32.mrf.mxu0
        %v1170 = vadd.f32 %v418, %v1169
        %1171 = vdwg.mxu0
        %1172 = vmatpush.bf16.msra.mxu0 %v1010
        %1173 = vmatpush.bf16.msra.mxu0 %v1009
        %1174 = vmatpush.bf16.msra.mxu0 %v1008
        %1175 = vmatpush.bf16.msra.mxu0 %v1007
        %1176 = vmatpush.bf16.msra.mxu0 %v1006
        %1177 = vmatpush.bf16.msra.mxu0 %v1005
        %1178 = vmatpush.bf16.msra.mxu0 %v1004
        %1179 = vmatpush.bf16.msra.mxu0 %v1003
        %1180 = vmatmul.bf16.gmra.mxu0 %v612
        %v1181 = vpop.f32.mrf.mxu0
        %v1182 = vadd.f32 %v1133, %v1181
        %v1183 = vpop.f32.mrf.mxu0
        %v1184 = vadd.f32 %v1135, %v1183
        %1185 = vmatmul.bf16.gmra.mxu0 %v620
        %v1186 = vpop.f32.mrf.mxu0
        %v1187 = vadd.f32 %v1138, %v1186
        %v1188 = vpop.f32.mrf.mxu0
        %v1189 = vadd.f32 %v1140, %v1188
        %1190 = vmatmul.bf16.gmra.mxu0 %v628
        %v1191 = vpop.f32.mrf.mxu0
        %v1192 = vadd.f32 %v1143, %v1191
        %v1193 = vpop.f32.mrf.mxu0
        %v1194 = vadd.f32 %v1145, %v1193
        %1195 = vmatmul.bf16.gmra.mxu0 %v636
        %v1196 = vpop.f32.mrf.mxu0
        %v1197 = vadd.f32 %v1148, %v1196
        %v1198 = vpop.f32.mrf.mxu0
        %v1199 = vadd.f32 %v1150, %v1198
        %1200 = vmatmul.bf16.gmra.mxu0 %v644
        %v1201 = vpop.f32.mrf.mxu0
        %v1202 = vadd.f32 %v1153, %v1201
        %v1203 = vpop.f32.mrf.mxu0
        %v1204 = vadd.f32 %v1155, %v1203
        %1205 = vmatmul.bf16.gmra.mxu0 %v652
        %v1206 = vpop.f32.mrf.mxu0
        %v1207 = vadd.f32 %v1158, %v1206
        %v1208 = vpop.f32.mrf.mxu0
        %v1209 = vadd.f32 %v1160, %v1208
        %1210 = vmatmul.bf16.gmra.mxu0 %v660
        %v1211 = vpop.f32.mrf.mxu0
        %v1212 = vadd.f32 %v1163, %v1211
        %v1213 = vpop.f32.mrf.mxu0
        %v1214 = vadd.f32 %v1165, %v1213
        %1215 = vmatmul.bf16.gmra.mxu0 %v668
        %v1216 = vpop.f32.mrf.mxu0
        %v1217 = vadd.f32 %v1168, %v1216
        %v1218 = vpop.f32.mrf.mxu0
        %v1219 = vadd.f32 %v1170, %v1218
        %1220 = vdwg.mxu0
        %1221 = vmatpush.bf16.msra.mxu0 %v1018
        %1222 = vmatpush.bf16.msra.mxu0 %v1017
        %1223 = vmatpush.bf16.msra.mxu0 %v1016
        %1224 = vmatpush.bf16.msra.mxu0 %v1015
        %1225 = vmatpush.bf16.msra.mxu0 %v1014
        %1226 = vmatpush.bf16.msra.mxu0 %v1013
        %1227 = vmatpush.bf16.msra.mxu0 %v1012
        %1228 = vmatpush.bf16.msra.mxu0 %v1011
        %1229 = vmatmul.bf16.gmra.mxu0 %v613
        %v1230 = vpop.f32.mrf.mxu0
        %v1231 = vadd.f32 %v1182, %v1230
        %v1232 = vpop.f32.mrf.mxu0
        %v1233 = vadd.f32 %v1184, %v1232
        %1234 = vmatmul.bf16.gmra.mxu0 %v621
        %v1235 = vpop.f32.mrf.mxu0
        %v1236 = vadd.f32 %v1187, %v1235
        %v1237 = vpop.f32.mrf.mxu0
        %v1238 = vadd.f32 %v1189, %v1237
        %1239 = vmatmul.bf16.gmra.mxu0 %v629
        %v1240 = vpop.f32.mrf.mxu0
        %v1241 = vadd.f32 %v1192, %v1240
        %v1242 = vpop.f32.mrf.mxu0
        %v1243 = vadd.f32 %v1194, %v1242
        %1244 = vmatmul.bf16.gmra.mxu0 %v637
        %v1245 = vpop.f32.mrf.mxu0
        %v1246 = vadd.f32 %v1197, %v1245
        %v1247 = vpop.f32.mrf.mxu0
        %v1248 = vadd.f32 %v1199, %v1247
        %1249 = vmatmul.bf16.gmra.mxu0 %v645
        %v1250 = vpop.f32.mrf.mxu0
        %v1251 = vadd.f32 %v1202, %v1250
        %v1252 = vpop.f32.mrf.mxu0
        %v1253 = vadd.f32 %v1204, %v1252
        %1254 = vmatmul.bf16.gmra.mxu0 %v653
        %v1255 = vpop.f32.mrf.mxu0
        %v1256 = vadd.f32 %v1207, %v1255
        %v1257 = vpop.f32.mrf.mxu0
        %v1258 = vadd.f32 %v1209, %v1257
        %1259 = vmatmul.bf16.gmra.mxu0 %v661
        %v1260 = vpop.f32.mrf.mxu0
        %v1261 = vadd.f32 %v1212, %v1260
        %v1262 = vpop.f32.mrf.mxu0
        %v1263 = vadd.f32 %v1214, %v1262
        %1264 = vmatmul.bf16.gmra.mxu0 %v669
        %v1265 = vpop.f32.mrf.mxu0
        %v1266 = vadd.f32 %v1217, %v1265
        %v1267 = vpop.f32.mrf.mxu0
        %v1268 = vadd.f32 %v1219, %v1267
        %1269 = vdwg.mxu0
        %1270 = vmatpush.bf16.msra.mxu0 %v1026
        %1271 = vmatpush.bf16.msra.mxu0 %v1025
        %1272 = vmatpush.bf16.msra.mxu0 %v1024
        %1273 = vmatpush.bf16.msra.mxu0 %v1023
        %1274 = vmatpush.bf16.msra.mxu0 %v1022
        %1275 = vmatpush.bf16.msra.mxu0 %v1021
        %1276 = vmatpush.bf16.msra.mxu0 %v1020
        %1277 = vmatpush.bf16.msra.mxu0 %v1019
        %1278 = vmatmul.bf16.gmra.mxu0 %v614
        %v1279 = vpop.f32.mrf.mxu0
        %v1280 = vadd.f32 %v1231, %v1279
        %v1281 = vpop.f32.mrf.mxu0
        %v1282 = vadd.f32 %v1233, %v1281
        %1283 = vmatmul.bf16.gmra.mxu0 %v622
        %v1284 = vpop.f32.mrf.mxu0
        %v1285 = vadd.f32 %v1236, %v1284
        %v1286 = vpop.f32.mrf.mxu0
        %v1287 = vadd.f32 %v1238, %v1286
        %1288 = vmatmul.bf16.gmra.mxu0 %v630
        %v1289 = vpop.f32.mrf.mxu0
        %v1290 = vadd.f32 %v1241, %v1289
        %v1291 = vpop.f32.mrf.mxu0
        %v1292 = vadd.f32 %v1243, %v1291
        %1293 = vmatmul.bf16.gmra.mxu0 %v638
        %v1294 = vpop.f32.mrf.mxu0
        %v1295 = vadd.f32 %v1246, %v1294
        %v1296 = vpop.f32.mrf.mxu0
        %v1297 = vadd.f32 %v1248, %v1296
        %1298 = vmatmul.bf16.gmra.mxu0 %v646
        %v1299 = vpop.f32.mrf.mxu0
        %v1300 = vadd.f32 %v1251, %v1299
        %v1301 = vpop.f32.mrf.mxu0
        %v1302 = vadd.f32 %v1253, %v1301
        %1303 = vmatmul.bf16.gmra.mxu0 %v654
        %v1304 = vpop.f32.mrf.mxu0
        %v1305 = vadd.f32 %v1256, %v1304
        %v1306 = vpop.f32.mrf.mxu0
        %v1307 = vadd.f32 %v1258, %v1306
        %1308 = vmatmul.bf16.gmra.mxu0 %v662
        %v1309 = vpop.f32.mrf.mxu0
        %v1310 = vadd.f32 %v1261, %v1309
        %v1311 = vpop.f32.mrf.mxu0
        %v1312 = vadd.f32 %v1263, %v1311
        %1313 = vmatmul.bf16.gmra.mxu0 %v670
        %v1314 = vpop.f32.mrf.mxu0
        %v1315 = vadd.f32 %v1266, %v1314
        %v1316 = vpop.f32.mrf.mxu0
        %v1317 = vadd.f32 %v1268, %v1316
        %1318 = vdwg.mxu0
        %1319 = vmatpush.bf16.msra.mxu0 %v1034
        %1320 = vmatpush.bf16.msra.mxu0 %v1033
        %1321 = vmatpush.bf16.msra.mxu0 %v1032
        %1322 = vmatpush.bf16.msra.mxu0 %v1031
        %1323 = vmatpush.bf16.msra.mxu0 %v1030
        %1324 = vmatpush.bf16.msra.mxu0 %v1029
        %1325 = vmatpush.bf16.msra.mxu0 %v1028
        %1326 = vmatpush.bf16.msra.mxu0 %v1027
        %1327 = vmatmul.bf16.gmra.mxu0 %v615
        %v1328 = vpop.f32.mrf.mxu0
        %v1329 = vadd.f32 %v1280, %v1328
        %v1330 = vpop.f32.mrf.mxu0
        %v1331 = vadd.f32 %v1282, %v1330
        %1332 = vmatmul.bf16.gmra.mxu0 %v623
        %v1333 = vpop.f32.mrf.mxu0
        %v1334 = vadd.f32 %v1285, %v1333
        %v1335 = vpop.f32.mrf.mxu0
        %v1336 = vadd.f32 %v1287, %v1335
        %1337 = vmatmul.bf16.gmra.mxu0 %v631
        %v1338 = vpop.f32.mrf.mxu0
        %v1339 = vadd.f32 %v1290, %v1338
        %v1340 = vpop.f32.mrf.mxu0
        %v1341 = vadd.f32 %v1292, %v1340
        %1342 = vmatmul.bf16.gmra.mxu0 %v639
        %v1343 = vpop.f32.mrf.mxu0
        %v1344 = vadd.f32 %v1295, %v1343
        %v1345 = vpop.f32.mrf.mxu0
        %v1346 = vadd.f32 %v1297, %v1345
        %1347 = vmatmul.bf16.gmra.mxu0 %v647
        %v1348 = vpop.f32.mrf.mxu0
        %v1349 = vadd.f32 %v1300, %v1348
        %v1350 = vpop.f32.mrf.mxu0
        %v1351 = vadd.f32 %v1302, %v1350
        %1352 = vmatmul.bf16.gmra.mxu0 %v655
        %v1353 = vpop.f32.mrf.mxu0
        %v1354 = vadd.f32 %v1305, %v1353
        %v1355 = vpop.f32.mrf.mxu0
        %v1356 = vadd.f32 %v1307, %v1355
        %1357 = vmatmul.bf16.gmra.mxu0 %v663
        %v1358 = vpop.f32.mrf.mxu0
        %v1359 = vadd.f32 %v1310, %v1358
        %v1360 = vpop.f32.mrf.mxu0
        %v1361 = vadd.f32 %v1312, %v1360
        %1362 = vmatmul.bf16.gmra.mxu0 %v671
        %v1363 = vpop.f32.mrf.mxu0
        %v1364 = vadd.f32 %v1315, %v1363
        %v1365 = vpop.f32.mrf.mxu0
        %v1366 = vadd.f32 %v1317, %v1365
        %1367 = vdwg.mxu0
        %1368 = vmatpush.bf16.msra.mxu0 %v1042
        %1369 = vmatpush.bf16.msra.mxu0 %v1041
        %1370 = vmatpush.bf16.msra.mxu0 %v1040
        %1371 = vmatpush.bf16.msra.mxu0 %v1039
        %1372 = vmatpush.bf16.msra.mxu0 %v1038
        %1373 = vmatpush.bf16.msra.mxu0 %v1037
        %1374 = vmatpush.bf16.msra.mxu0 %v1036
        %1375 = vmatpush.bf16.msra.mxu0 %v1035
        %1376 = vmatmul.bf16.gmra.mxu0 %v616
        %v1377 = vpop.f32.mrf.mxu0
        %v1378 = vadd.f32 %v1329, %v1377
        %v1379 = vpop.f32.mrf.mxu0
        %v1380 = vadd.f32 %v1331, %v1379
        %1381 = vmatmul.bf16.gmra.mxu0 %v624
        %v1382 = vpop.f32.mrf.mxu0
        %v1383 = vadd.f32 %v1334, %v1382
        %v1384 = vpop.f32.mrf.mxu0
        %v1385 = vadd.f32 %v1336, %v1384
        %1386 = vmatmul.bf16.gmra.mxu0 %v632
        %v1387 = vpop.f32.mrf.mxu0
        %v1388 = vadd.f32 %v1339, %v1387
        %v1389 = vpop.f32.mrf.mxu0
        %v1390 = vadd.f32 %v1341, %v1389
        %1391 = vmatmul.bf16.gmra.mxu0 %v640
        %v1392 = vpop.f32.mrf.mxu0
        %v1393 = vadd.f32 %v1344, %v1392
        %v1394 = vpop.f32.mrf.mxu0
        %v1395 = vadd.f32 %v1346, %v1394
        %1396 = vmatmul.bf16.gmra.mxu0 %v648
        %v1397 = vpop.f32.mrf.mxu0
        %v1398 = vadd.f32 %v1349, %v1397
        %v1399 = vpop.f32.mrf.mxu0
        %v1400 = vadd.f32 %v1351, %v1399
        %1401 = vmatmul.bf16.gmra.mxu0 %v656
        %v1402 = vpop.f32.mrf.mxu0
        %v1403 = vadd.f32 %v1354, %v1402
        %v1404 = vpop.f32.mrf.mxu0
        %v1405 = vadd.f32 %v1356, %v1404
        %1406 = vmatmul.bf16.gmra.mxu0 %v664
        %v1407 = vpop.f32.mrf.mxu0
        %v1408 = vadd.f32 %v1359, %v1407
        %v1409 = vpop.f32.mrf.mxu0
        %v1410 = vadd.f32 %v1361, %v1409
        %1411 = vmatmul.bf16.gmra.mxu0 %v672
        %v1412 = vpop.f32.mrf.mxu0
        %v1413 = vadd.f32 %v1364, %v1412
        %v1414 = vpop.f32.mrf.mxu0
        %v1415 = vadd.f32 %v1366, %v1414
        %1416 = vdwg.mxu0
        %1417 = vmatpush.bf16.msra.mxu0 %v1050
        %1418 = vmatpush.bf16.msra.mxu0 %v1049
        %1419 = vmatpush.bf16.msra.mxu0 %v1048
        %1420 = vmatpush.bf16.msra.mxu0 %v1047
        %1421 = vmatpush.bf16.msra.mxu0 %v1046
        %1422 = vmatpush.bf16.msra.mxu0 %v1045
        %1423 = vmatpush.bf16.msra.mxu0 %v1044
        %1424 = vmatpush.bf16.msra.mxu0 %v1043
        %1425 = vmatmul.bf16.gmra.mxu0 %v617
        %v1426 = vpop.f32.mrf.mxu0
        %v1427 = vadd.f32 %v1378, %v1426
        %v1428 = vpop.f32.mrf.mxu0
        %v1429 = vadd.f32 %v1380, %v1428
        %1430 = vmatmul.bf16.gmra.mxu0 %v625
        %v1431 = vpop.f32.mrf.mxu0
        %v1432 = vadd.f32 %v1383, %v1431
        %v1433 = vpop.f32.mrf.mxu0
        %v1434 = vadd.f32 %v1385, %v1433
        %1435 = vmatmul.bf16.gmra.mxu0 %v633
        %v1436 = vpop.f32.mrf.mxu0
        %v1437 = vadd.f32 %v1388, %v1436
        %v1438 = vpop.f32.mrf.mxu0
        %v1439 = vadd.f32 %v1390, %v1438
        %1440 = vmatmul.bf16.gmra.mxu0 %v641
        %v1441 = vpop.f32.mrf.mxu0
        %v1442 = vadd.f32 %v1393, %v1441
        %v1443 = vpop.f32.mrf.mxu0
        %v1444 = vadd.f32 %v1395, %v1443
        %1445 = vmatmul.bf16.gmra.mxu0 %v649
        %v1446 = vpop.f32.mrf.mxu0
        %v1447 = vadd.f32 %v1398, %v1446
        %v1448 = vpop.f32.mrf.mxu0
        %v1449 = vadd.f32 %v1400, %v1448
        %1450 = vmatmul.bf16.gmra.mxu0 %v657
        %v1451 = vpop.f32.mrf.mxu0
        %v1452 = vadd.f32 %v1403, %v1451
        %v1453 = vpop.f32.mrf.mxu0
        %v1454 = vadd.f32 %v1405, %v1453
        %1455 = vmatmul.bf16.gmra.mxu0 %v665
        %v1456 = vpop.f32.mrf.mxu0
        %v1457 = vadd.f32 %v1408, %v1456
        %v1458 = vpop.f32.mrf.mxu0
        %v1459 = vadd.f32 %v1410, %v1458
        %1460 = vmatmul.bf16.gmra.mxu0 %v673
        %v1461 = vpop.f32.mrf.mxu0
        %v1462 = vadd.f32 %v1413, %v1461
        %v1463 = vpop.f32.mrf.mxu0
        %v1464 = vadd.f32 %v1415, %v1463
        %1465 = vdwg.mxu0
        %1466 = vmatpush.bf16.msra.mxu0 %v1058
        %1467 = vmatpush.bf16.msra.mxu0 %v1057
        %1468 = vmatpush.bf16.msra.mxu0 %v1056
        %1469 = vmatpush.bf16.msra.mxu0 %v1055
        %1470 = vmatpush.bf16.msra.mxu0 %v1054
        %1471 = vmatpush.bf16.msra.mxu0 %v1053
        %1472 = vmatpush.bf16.msra.mxu0 %v1052
        %1473 = vmatpush.bf16.msra.mxu0 %v1051
        %1474 = vmatmul.bf16.gmra.mxu0 %v618
        %v1475 = vpop.f32.mrf.mxu0
        %v1476 = vadd.f32 %v1427, %v1475
        %v1477 = vpop.f32.mrf.mxu0
        %v1478 = vadd.f32 %v1429, %v1477
        %1479 = vmatmul.bf16.gmra.mxu0 %v626
        %v1480 = vpop.f32.mrf.mxu0
        %v1481 = vadd.f32 %v1432, %v1480
        %v1482 = vpop.f32.mrf.mxu0
        %v1483 = vadd.f32 %v1434, %v1482
        %1484 = vmatmul.bf16.gmra.mxu0 %v634
        %v1485 = vpop.f32.mrf.mxu0
        %v1486 = vadd.f32 %v1437, %v1485
        %v1487 = vpop.f32.mrf.mxu0
        %v1488 = vadd.f32 %v1439, %v1487
        %1489 = vmatmul.bf16.gmra.mxu0 %v642
        %v1490 = vpop.f32.mrf.mxu0
        %v1491 = vadd.f32 %v1442, %v1490
        %v1492 = vpop.f32.mrf.mxu0
        %v1493 = vadd.f32 %v1444, %v1492
        %1494 = vmatmul.bf16.gmra.mxu0 %v650
        %v1495 = vpop.f32.mrf.mxu0
        %v1496 = vadd.f32 %v1447, %v1495
        %v1497 = vpop.f32.mrf.mxu0
        %v1498 = vadd.f32 %v1449, %v1497
        %1499 = vmatmul.bf16.gmra.mxu0 %v658
        %v1500 = vpop.f32.mrf.mxu0
        %v1501 = vadd.f32 %v1452, %v1500
        %v1502 = vpop.f32.mrf.mxu0
        %v1503 = vadd.f32 %v1454, %v1502
        %1504 = vmatmul.bf16.gmra.mxu0 %v666
        %v1505 = vpop.f32.mrf.mxu0
        %v1506 = vadd.f32 %v1457, %v1505
        %v1507 = vpop.f32.mrf.mxu0
        %v1508 = vadd.f32 %v1459, %v1507
        %1509 = vmatmul.bf16.gmra.mxu0 %v674
        %v1510 = vpop.f32.mrf.mxu0
        %v1511 = vadd.f32 %v1462, %v1510
        %v1512 = vpop.f32.mrf.mxu0
        %v1513 = vadd.f32 %v1464, %v1512
        %1514 = vdwg.mxu0
        %v1515 = vmax.f32 %v1476, 0.0
        %v1516 = vmax.f32 %v1478, 0.0
        %v1517 = vmax.f32 %v1481, 0.0
        %v1518 = vmax.f32 %v1483, 0.0
        %v1519 = vmax.f32 %v1486, 0.0
        %v1520 = vmax.f32 %v1488, 0.0
        %v1521 = vmax.f32 %v1491, 0.0
        %v1522 = vmax.f32 %v1493, 0.0
        %v1523 = vmax.f32 %v1496, 0.0
        %v1524 = vmax.f32 %v1498, 0.0
        %v1525 = vmax.f32 %v1501, 0.0
        %v1526 = vmax.f32 %v1503, 0.0
        %v1527 = vmax.f32 %v1506, 0.0
        %v1528 = vmax.f32 %v1508, 0.0
        %v1529 = vmax.f32 %v1511, 0.0
        %v1530 = vmax.f32 %v1513, 0.0
        %v1531 = vld [vmem:[#allocation7 + $0x1] sm:$0x1]
        %v1532 = vperm.slane %v1531, 0
        %v1533 = vmul.f32 %v1515, %v1532
        %v1534 = vmul.f32 %v1516, %v1532
        %v1535 = vmul.f32 %v1517, %v1532
        %v1536 = vmul.f32 %v1518, %v1532
        %v1537 = vmul.f32 %v1519, %v1532
        %v1538 = vmul.f32 %v1520, %v1532
        %v1539 = vmul.f32 %v1521, %v1532
        %v1540 = vmul.f32 %v1522, %v1532
        %v1541 = vmul.f32 %v1523, %v1532
        %v1542 = vmul.f32 %v1524, %v1532
        %v1543 = vmul.f32 %v1525, %v1532
        %v1544 = vmul.f32 %v1526, %v1532
        %v1545 = vmul.f32 %v1527, %v1532
        %v1546 = vmul.f32 %v1528, %v1532
        %v1547 = vmul.f32 %v1529, %v1532
        %v1548 = vmul.f32 %v1530, %v1532
        %1549 = vst [vmem:[%s222] sm:$0xff] %v1533
        %1550 = vst [vmem:[%s222 + $0x8] sm:$0xff] %v1534
        %1551 = vst [vmem:[%s222 + $0x10] sm:$0xff] %v1535
        %1552 = vst [vmem:[%s222 + $0x18] sm:$0xff] %v1536
        %1553 = vst [vmem:[%s222 + $0x20] sm:$0xff] %v1537
        %1554 = vst [vmem:[%s222 + $0x28] sm:$0xff] %v1538
        %1555 = vst [vmem:[%s222 + $0x30] sm:$0xff] %v1539
        %1556 = vst [vmem:[%s222 + $0x38] sm:$0xff] %v1540
        %1557 = vst [vmem:[%s222 + $0x40] sm:$0xff] %v1541
        %1558 = vst [vmem:[%s222 + $0x48] sm:$0xff] %v1542
        %1559 = vst [vmem:[%s222 + $0x50] sm:$0xff] %v1543
        %1560 = vst [vmem:[%s222 + $0x58] sm:$0xff] %v1544
        %1561 = vst [vmem:[%s222 + $0x60] sm:$0xff] %v1545
        %1562 = vst [vmem:[%s222 + $0x68] sm:$0xff] %v1546
        %1563 = vst [vmem:[%s222 + $0x70] sm:$0xff] %v1547
        %1564 = vst [vmem:[%s222 + $0x78] sm:$0xff] %v1548
        %s1565 = sand.u32 %s97, 1
        %s1566 = scalar_lea.sflag [#allocation4], %s1565
        %s1567 = sand.u32 %s97, 1
        %s1568 = smul.addr %s1567, 128
        %s1569 = scalar_lea.vmem [#allocation8], %s1568
        // Predicated region
        $region45: #{tpu_custom_call.1} parent=31 // pred_check
          %p1570 = pneg %p107
        $region46: #{tpu_custom_call.1} parent=31 // pred_check_branch
          %1572 = sbr.rel (%p1570) target = $region48
        $region47: #{tpu_custom_call.1} parent=31 // pred_region
          %s1573 = smul.u32 16, %s21
          %1575 = vsyncadd %s1566, 0
          %s1576 = smul.addr %s1573, 8
          %s1577 = scalar_lea.hbm %s3, %s1576
          %s1578 = sshll.u32 %s1569, 4
          %s1579 = int_to_ptr.vmem [resolvable:$true] %s1578
          %s1580 = sshll.u32 %s1577, 4
          %s1581 = int_to_ptr.hbm [resolvable:$true] %s1580
          %1586 = dma.vmem_to_hbm [thread:$0]  %s1579, 2048, %s1581, %s1566, 128, 128, 8
        $region48: #{tpu_custom_call.1} parent=31 // pred_fallthru
          _
      $region32: #{tpu_custom_call.1} parent=5 // pred_fallthru
        _
      %p1587 = scmp.le.s32.totalorder 2, %s16
      // Predicated region
      $region49: #{tpu_custom_call.1} parent=5 // pred_check
        %p1588 = pneg %p1587
      $region50: #{tpu_custom_call.1} parent=5 // pred_check_branch
        %1590 = sbr.rel (%p1588) target = $region52
      $region51: #{tpu_custom_call.1} parent=5 // pred_region
        %s1591 = ssub.s32 %s16, 2
        // Predicated region
        $region53: #{tpu_custom_call.1} parent=51 // pred_check
          %p1592 = pneg %p113
        $region54: #{tpu_custom_call.1} parent=51 // pred_check_branch
          %1594 = sbr.rel (%p1592) target = $region56
        $region55: #{tpu_custom_call.1} parent=51 // pred_region
          %s1595 = sand.u32 %s98, 1
          %s1596 = scalar_lea.sflag [#allocation4], %s1595
          %s1597 = sand.u32 %s98, 1
          %s1598 = smul.addr %s1597, 128
          %s1599 = scalar_lea.vmem [#allocation8], %s1598
          %1601 = dma.done %s1596, 2048
        $region56: #{tpu_custom_call.1} parent=51 // pred_fallthru
          _
      $region52: #{tpu_custom_call.1} parent=5 // pred_fallthru
        _
    $region6: #{tpu_custom_call.1} parent=1 // loop_footer
      %s20 = sadd.s32 1, %s16
    $region7: #{tpu_custom_call.1} parent=1 // loop_footer_branch
      %15 = sbr.rel target = $region3
    $region8: #{tpu_custom_call.1} parent=1 // loop_exit
      _
    %1602 = vsyncpa [#allocation3], 1
    %s1603 = scalar_lea.sflag [#allocation3], 1
    %1604 = vsyncpa %s1603, 1
    %1605 = vsyncpa [#allocation6], 1
    %1606 = vsyncpa [#allocation4], 1
    %s1607 = scalar_lea.sflag [#allocation4], 1
    %1608 = vsyncpa %s1607, 1

</llo_original>
